<compile_context>
chip_gen: v7x
topology: tpu7x:2x2x1
jax: 0.10.0
libtpu: 0.0.40
codegen_flags: <defaults>
</compile_context>

<pallas_src>
import functools
import math

import jax
import jax.numpy as jnp
from jax.experimental import pallas as pl
from jax.experimental.pallas import tpu as pltpu


# (a, b) taps of the 2x2 phase-space kernel the stride-2 4x4 conv collapses to.
_DOWN_TAPS = ((0, 0), (0, 1), (1, 0), (1, 1))
# Output-pixel parities (py, px) of the ConvTranspose2d phase decomposition.
_PHASES = ((0, 0), (0, 1), (1, 0), (1, 1))
# Per parity: (input offset relative to output index, kernel tap index).
_UP_TAPS = {0: ((-1, 3), (0, 1)), 1: ((0, 2), (1, 0))}
# The 9 distinct (row, col) activation shifts used across all 4 up-conv parities.
_SHIFTS = tuple((ry, rx) for ry in (-1, 0, 1) for rx in (-1, 0, 1))


def _round_up(v, m):
    return (v + m - 1) // m * m


# ------------------------------ fused Pallas kernel ---------------------------
def _unet_fused_kernel(xs_ref, wd_ref, bd_ref, wu_ref, bu_ref, mask_ref, o_ref,
                       xstg_ref, act_ref, astg_ref,
                       *, w_row, p_wide, lead, inv_nd, inv_nu, neg_slope,
                       out_nc, opad):
    cpad = xs_ref.shape[0]
    inner_pad = act_ref.shape[0]

    # ---- down: Conv2d(4x4, s=2, p=1 reflect) == 4-tap 2x2 conv in phase space.
    # K-stack the 4 shifted contiguous lane slices in VMEM -> ONE bf16 matmul.
    for t, (a, b) in enumerate(_DOWN_TAPS):
        off = a * w_row + b
        xstg_ref[t * cpad:(t + 1) * cpad, :] = xs_ref[:, off:off + p_wide]

    y = jnp.dot(wd_ref[...], xstg_ref[...], preferred_element_type=jnp.float32)
    y = y + bd_ref[...]                                # (inner_pad, p_wide) f32

    # InstanceNorm (affine=False, biased var, eps=1e-5) over valid positions
    # + LeakyReLU.  Single hoisted mask broadcast, reused.
    mask = mask_ref[...]                               # (1, p_wide) f32
    maskd = jnp.broadcast_to(mask, y.shape)
    ym = y * maskd
    mean = jnp.sum(ym, axis=1, keepdims=True) * inv_nd
    d = (y - mean) * maskd
    var = jnp.sum(d * d, axis=1, keepdims=True) * inv_nd
    a_dn = d * jax.lax.rsqrt(var + 1e-5)
    a_dn = jnp.where(a_dn > 0, a_dn, neg_slope * a_dn)  # pad rows/cols stay exactly 0

    # Stage activation (bf16) with a zero halo; zero ONLY the two halo slices.
    act_ref[:, :lead] = jnp.zeros((inner_pad, lead), act_ref.dtype)
    tail = act_ref.shape[1] - (lead + p_wide)
    act_ref[:, lead + p_wide:] = jnp.zeros((inner_pad, tail), act_ref.dtype)
    act_ref[:, lead:lead + p_wide] = a_dn.astype(act_ref.dtype)

    # K-stack the 9 distinct spatial shifts of the activation for the up conv.
    for s, (ry, rx) in enumerate(_SHIFTS):
        start = lead + ry * w_row + rx
        astg_ref[s * inner_pad:(s + 1) * inner_pad, :] = act_ref[:, start:start + p_wide]

    # ---- up: ConvTranspose2d(4x4, s=2, p=1), phase-decomposed.  ONE bf16
    # matmul: 4 output parities stacked along M, 9 shifts stacked along K.
    pre = jnp.dot(wu_ref[...], astg_ref[...], preferred_element_type=jnp.float32)
    pre = pre + bu_ref[...]                            # (4*opad, p_wide) f32

    # InstanceNorm over all 4 phases (full output spatial extent) + ReLU.
    masku = jnp.broadcast_to(mask, pre.shape)
    rs = jnp.sum(pre * masku, axis=1, keepdims=True)   # (4*opad, 1)
    ch = rs[0:opad] + rs[opad:2 * opad] + rs[2 * opad:3 * opad] + rs[3 * opad:4 * opad]
    mean_u = jnp.concatenate([ch * inv_nu] * 4, axis=0)        # (4*opad, 1)
    du = (pre - mean_u) * masku
    vr = jnp.sum(du * du, axis=1, keepdims=True)
    chv = vr[0:opad] + vr[opad:2 * opad] + vr[2 * opad:3 * opad] + vr[3 * opad:4 * opad]
    scale = jnp.concatenate([jax.lax.rsqrt(chv * inv_nu + 1e-5)] * 4, axis=0)
    outv = jnp.maximum(du * scale, 0.0)                # pad columns stay 0

    for ph in range(4):                                # lane-dense phase stores
        o_ref[:, ph * p_wide:(ph + 1) * p_wide] = (
            outv[ph * opad:ph * opad + out_nc, :].astype(o_ref.dtype))


# --------------------------------- wrapper -------------------------------------
def unet_module_forward(x, z, params):
    """Forward of UNetModule(inner_module=None, upsample='basic', is_outermost=False)."""
    N, cx, H, W = x.shape
    assert H % 2 == 0 and W % 2 == 0

    # z.numel() == 0 -> skip; else broadcast z over spatial and concat on channels.
    if z.size == 0:
        xz = x
    else:
        z_enc = jnp.broadcast_to(z[:, :, None, None], (N, z.shape[1], H, W))
        xz = jnp.concatenate([x, z_enc], axis=1)
    c_in = xz.shape[1]

    wd, bd = params["w_down"], params["b_down"]        # (inner, c_in, 4, 4), (inner,)
    wu, bu = params["w_up"], params["b_up"]            # (inner, out, 4, 4),  (out,)
    inner_nc = wd.shape[0]
    out_nc = wu.shape[1]

    ho, wo = H // 2, W // 2
    hh, wh = ho + 1, wo + 1                            # phase-split padded spatial dims
    w_row = _round_up(wo + 1, 8)                       # wide row stride (>= wo + 1, invariant)
    # Pad the row count so p_wide is a multiple of 128 for ANY H,W (lane-dense stores).
    m = 128 // math.gcd(w_row, 128)
    ho_pad = _round_up(ho, m)
    p_wide = ho_pad * w_row
    lead = _round_up(w_row + 1, 128)                   # zero halo around staged activation
    tail = _round_up(w_row + 1, 128)

    c4 = 4 * c_in
    cpad = _round_up(c4, 16)                           # bf16 sublane tile = 16
    inner_pad = _round_up(inner_nc, 16)
    opad = _round_up(out_nc, 8)
    flat_in = (ho_pad + 2) * w_row

    # ---- non-expanding input prep: reflect pad + space-to-depth by the stride,
    # packed bf16 (halves HBM read of the dominant input block).
    xp = jnp.pad(xz, ((0, 0), (0, 0), (1, 1), (1, 1)), mode="reflect")     # (N,C,H+2,W+2)
    xs = xp.reshape(N, c_in, hh, 2, wh, 2).transpose(0, 1, 3, 5, 2, 4)     # (N,C,dy,dx,hh,wh)
    xs = xs.reshape(N, c4, hh, wh)
    xs = jnp.pad(xs, ((0, 0), (0, cpad - c4), (0, (ho_pad + 2) - hh), (0, w_row - wh)))
    xs_flat = xs.reshape(N, cpad, flat_in).astype(jnp.bfloat16)

    # ---- down weights: 4x4/s2 kernel -> taps K-stacked into (inner_pad, 4*cpad).
    wd2 = wd.reshape(inner_nc, c_in, 2, 2, 2, 2)        # (co, ci, a, dy, b, dx)
    wd2 = wd2.transpose(0, 1, 3, 5, 2, 4)               # (co, ci, dy, dx, a, b)
    wd2 = wd2.reshape(inner_nc, c4, 2, 2)
    wd2 = jnp.pad(wd2, ((0, inner_pad - inner_nc), (0, cpad - c4), (0, 0), (0, 0)))
    wd_big = jnp.concatenate([wd2[:, :, a, b] for (a, b) in _DOWN_TAPS],
                             axis=1).astype(jnp.bfloat16)          # (inner_pad, 4*cpad)
    bd_col = jnp.pad(bd, (0, inner_pad - inner_nc)).reshape(inner_pad, 1)

    # ---- up weights: 4 parities M-stacked, 9 shifts K-stacked -> (4*opad, 9*inner_pad).
    wu_big = jnp.zeros((4 * opad, 9 * inner_pad), jnp.float32)
    for ph, (py, px) in enumerate(_PHASES):
        for (ry, ky) in _UP_TAPS[py]:
            for (rx, kx) in _UP_TAPS[px]:
                s = _SHIFTS.index((ry, rx))
                blk = wu[:, :, ky, kx].T                 # (out_nc, inner_nc)
                wu_big = wu_big.at[ph * opad:ph * opad + out_nc,
                                   s * inner_pad:s * inner_pad + inner_nc].set(blk)
    wu_big = wu_big.astype(jnp.bfloat16)
    bu_pad = jnp.zeros((opad,), jnp.float32).at[:out_nc].set(bu)
    bu_col = jnp.tile(bu_pad, 4).reshape(4 * opad, 1)

    # Valid-position mask of the wide row layout (shared by down and up paths).
    pos = jnp.arange(p_wide)
    mask = (((pos % w_row) < wo) & ((pos // w_row) < ho)).astype(jnp.float32)
    mask = mask.reshape(1, p_wide)

    sq = pl.Squeezed() if hasattr(pl, "Squeezed") else None
    kernel = functools.partial(
        _unet_fused_kernel, w_row=w_row, p_wide=p_wide, lead=lead,
        inv_nd=1.0 / (ho * wo), inv_nu=1.0 / (4 * ho * wo),
        neg_slope=0.2, out_nc=out_nc, opad=opad)

    flops = int(N * 2 * p_wide * (inner_pad * 4 * cpad + 4 * opad * 9 * inner_pad))
    bytes_accessed = int(N * (2 * cpad * flat_in + 4 * out_nc * 4 * p_wide)
                         + 2 * (inner_pad * 4 * cpad + 4 * opad * 9 * inner_pad)
                         + 4 * (inner_pad + 4 * opad + p_wide))
    cost = pl.CostEstimate(flops=flops,
                           transcendentals=int(N * (inner_pad + opad)),
                           bytes_accessed=bytes_accessed)

    out_wide = pl.pallas_call(
        kernel,
        out_shape=jax.ShapeDtypeStruct((N, out_nc, 4 * p_wide), jnp.float32),
        grid_spec=pltpu.PrefetchScalarGridSpec(
            num_scalar_prefetch=0,
            grid=(N,),
            in_specs=[
                pl.BlockSpec((sq, cpad, flat_in), lambda n: (n, 0, 0)),
                pl.BlockSpec((inner_pad, 4 * cpad), lambda n: (0, 0)),
                pl.BlockSpec((inner_pad, 1), lambda n: (0, 0)),
                pl.BlockSpec((4 * opad, 9 * inner_pad), lambda n: (0, 0)),
                pl.BlockSpec((4 * opad, 1), lambda n: (0, 0)),
                pl.BlockSpec((1, p_wide), lambda n: (0, 0)),
            ],
            out_specs=pl.BlockSpec((sq, out_nc, 4 * p_wide), lambda n: (n, 0, 0)),
            scratch_shapes=[
                pltpu.VMEM((4 * cpad, p_wide), jnp.bfloat16),               # K-stacked taps
                pltpu.VMEM((inner_pad, lead + p_wide + tail), jnp.bfloat16),  # act + halo
                pltpu.VMEM((9 * inner_pad, p_wide), jnp.bfloat16),          # K-stacked shifts
            ],
        ),
        compiler_params=pltpu.CompilerParams(
            dimension_semantics=("parallel",),          # batch across v7x cores when N>=2
            vmem_limit_bytes=32 * 1024 * 1024),
        cost_estimate=cost,
    )(xs_flat, wd_big, bd_col, wu_big, bu_col, mask)

    # Interleave the 4 parity phases back to NCHW (final small output only).
    yw = out_wide.reshape(N, out_nc, 2, 2, ho_pad, w_row)[..., :ho, :wo]
    y_up = yw.transpose(0, 1, 4, 2, 5, 3).reshape(N, out_nc, H, W)

    # is_outermost=False -> skip connection concat.
    return jnp.concatenate([x, y_up], axis=1)


# ----------------------------- pure-JAX reference ------------------------------
def _inorm(y):
    m = y.mean(axis=(2, 3), keepdims=True)
    v = ((y - m) ** 2).mean(axis=(2, 3), keepdims=True)
    return (y - m) * jax.lax.rsqrt(v + 1e-5)


def unet_module_reference(x, z, params):
    N, Cx, H, W = x.shape
    if z.size == 0:
        xz = x
    else:
        z_enc = jnp.broadcast_to(z[:, :, None, None], (N, z.shape[1], H, W))
        xz = jnp.concatenate([x, z_enc], axis=1)
    xp = jnp.pad(xz, ((0, 0), (0, 0), (1, 1), (1, 1)), mode="reflect")
    y = jax.lax.conv_general_dilated(
        xp, params["w_down"], (2, 2), "VALID",
        dimension_numbers=("NCHW", "OIHW", "NCHW"))
    y = y + params["b_down"][None, :, None, None]
    y = _inorm(y)
    y = jnp.where(y > 0, y, 0.2 * y)
    w_up_conv = jnp.flip(params["w_up"], axis=(2, 3)).transpose(1, 0, 2, 3)
    y2 = jax.lax.conv_general_dilated(
        y, w_up_conv, (1, 1), ((2, 2), (2, 2)), lhs_dilation=(2, 2),
        dimension_numbers=("NCHW", "OIHW", "NCHW"))
    y2 = y2 + params["b_up"][None, :, None, None]
    y2 = _inorm(y2)
    y2 = jnp.maximum(y2, 0.0)
    return jnp.concatenate([x, y2], axis=1)


# ------------------------------------ main --------------------------------------
if __name__ == "__main__":
    # Small shapes consistent with the module: NCHW input, z is a latent vector.
    N, Cx, H, W = 2, 4, 16, 16
    Cz = 3                      # z channels (z.numel() != 0 path)
    input_nc = Cx + Cz          # down conv sees x concat z
    inner_nc = 8
    output_nc = 4

    key = jax.random.PRNGKey(0)
    kx, kz, k1, k2, k3, k4 = jax.random.split(key, 6)

    x = jax.random.normal(kx, (N, Cx, H, W), jnp.float32)
    z = jax.random.normal(kz, (N, Cz), jnp.float32)

    params = {
        # Conv2d weight: [out, in, kh, kw]
        "w_down": 0.1 * jax.random.normal(k1, (inner_nc, input_nc, 4, 4), jnp.float32),
        "b_down": 0.1 * jax.random.normal(k2, (inner_nc,), jnp.float32),
        # ConvTranspose2d weight: [in, out, kh, kw]
        "w_up": 0.1 * jax.random.normal(k3, (inner_nc, output_nc, 4, 4), jnp.float32),
        "b_up": 0.1 * jax.random.normal(k4, (output_nc,), jnp.float32),
    }

    out = jax.block_until_ready(jax.jit(unet_module_forward)(x, z, params))
    ref = jax.block_until_ready(unet_module_reference(x, z, params))

    assert out.shape == (N, Cx + output_nc, H, W), out.shape
    # bf16 MXU path (inputs, weights, staged activation in bf16; norms in f32):
    # tolerance is looser than the previous f32-exact version.
    max_err = float(jnp.max(jnp.abs(out - ref)))
    assert jnp.allclose(out, ref, atol=1e-1, rtol=1e-1), max_err

    print("KERNEL_OK")
</pallas_src>

<mosaic_0001>
module attributes {stable_mosaic.version = 11 : i64} {
  func.func @_unet_fused_kernel(%arg0: i32, %arg1: memref<1x32x160xbf16, #tpu.memory_space<vmem>>, %arg2: memref<16x128xbf16, #tpu.memory_space<vmem>>, %arg3: memref<16x1xf32, #tpu.memory_space<vmem>>, %arg4: memref<32x144xbf16, #tpu.memory_space<vmem>>, %arg5: memref<32x1xf32, #tpu.memory_space<vmem>>, %arg6: memref<1x128xf32, #tpu.memory_space<vmem>>, %arg7: memref<1x4x512xf32, #tpu.memory_space<vmem>>, %arg8: memref<128x128xbf16, #tpu.memory_space<vmem>>, %arg9: memref<16x384xbf16, #tpu.memory_space<vmem>>, %arg10: memref<144x128xbf16, #tpu.memory_space<vmem>>) attributes {dimension_semantics = [#tpu.dimension_semantics<parallel>], iteration_bounds = array<i64: 2>, scalar_prefetch = 0 : i64, scratch_operands = 3 : i64, tpu.core_type = #tpu.core_type<tc>, window_params = [{transform_indices = @transform_0, window_bounds = array<i64: 1, 32, 160>}, {pipeline_mode = #tpu.pipeline_mode<synchronous>, transform_indices = @transform_1, window_bounds = array<i64: 16, 128>}, {pipeline_mode = #tpu.pipeline_mode<synchronous>, transform_indices = @transform_2, window_bounds = array<i64: 16, 1>}, {pipeline_mode = #tpu.pipeline_mode<synchronous>, transform_indices = @transform_3, window_bounds = array<i64: 32, 144>}, {pipeline_mode = #tpu.pipeline_mode<synchronous>, transform_indices = @transform_4, window_bounds = array<i64: 32, 1>}, {pipeline_mode = #tpu.pipeline_mode<synchronous>, transform_indices = @transform_5, window_bounds = array<i64: 1, 128>}, {transform_indices = @transform_6, window_bounds = array<i64: 1, 4, 512>}]} {
    %c0 = arith.constant 0 : index
    %c0_0 = arith.constant 0 : index
    %c0_1 = arith.constant 0 : index
    %0 = vector.load %arg1[%c0, %c0_0, %c0_1] : memref<1x32x160xbf16, #tpu.memory_space<vmem>>, vector<1x32x128xbf16>
    %1 = vector.shape_cast %0 : vector<1x32x128xbf16> to vector<32x128xbf16>
    %c0_2 = arith.constant 0 : index
    %c0_3 = arith.constant 0 : index
    %2 = vector.load %arg8[%c0_2, %c0_3] : memref<128x128xbf16, #tpu.memory_space<vmem>>, vector<32x128xbf16>
    tpu.vector_store %arg8[%c0_2, %c0_3], %1 {strides = array<i32>} : memref<128x128xbf16, #tpu.memory_space<vmem>>, vector<32x128xbf16>,
    %c0_4 = arith.constant 0 : index
    %c0_5 = arith.constant 0 : index
    %c1 = arith.constant 1 : index
    %3 = vector.load %arg1[%c0_4, %c0_5, %c1] : memref<1x32x160xbf16, #tpu.memory_space<vmem>>, vector<1x32x128xbf16>
    %4 = vector.shape_cast %3 : vector<1x32x128xbf16> to vector<32x128xbf16>
    %c32 = arith.constant 32 : index
    %c0_6 = arith.constant 0 : index
    %5 = vector.load %arg8[%c32, %c0_6] : memref<128x128xbf16, #tpu.memory_space<vmem>>, vector<32x128xbf16>
    tpu.vector_store %arg8[%c32, %c0_6], %4 {strides = array<i32>} : memref<128x128xbf16, #tpu.memory_space<vmem>>, vector<32x128xbf16>,
    %c0_7 = arith.constant 0 : index
    %c0_8 = arith.constant 0 : index
    %c16 = arith.constant 16 : index
    %6 = vector.load %arg1[%c0_7, %c0_8, %c16] : memref<1x32x160xbf16, #tpu.memory_space<vmem>>, vector<1x32x128xbf16>
    %7 = vector.shape_cast %6 : vector<1x32x128xbf16> to vector<32x128xbf16>
    %c64 = arith.constant 64 : index
    %c0_9 = arith.constant 0 : index
    %8 = vector.load %arg8[%c64, %c0_9] : memref<128x128xbf16, #tpu.memory_space<vmem>>, vector<32x128xbf16>
    tpu.vector_store %arg8[%c64, %c0_9], %7 {strides = array<i32>} : memref<128x128xbf16, #tpu.memory_space<vmem>>, vector<32x128xbf16>,
    %c0_10 = arith.constant 0 : index
    %c0_11 = arith.constant 0 : index
    %c17 = arith.constant 17 : index
    %9 = vector.load %arg1[%c0_10, %c0_11, %c17] : memref<1x32x160xbf16, #tpu.memory_space<vmem>>, vector<1x32x128xbf16>
    %10 = vector.shape_cast %9 : vector<1x32x128xbf16> to vector<32x128xbf16>
    %c96 = arith.constant 96 : index
    %c0_12 = arith.constant 0 : index
    %11 = vector.load %arg8[%c96, %c0_12] : memref<128x128xbf16, #tpu.memory_space<vmem>>, vector<32x128xbf16>
    tpu.vector_store %arg8[%c96, %c0_12], %10 {strides = array<i32>} : memref<128x128xbf16, #tpu.memory_space<vmem>>, vector<32x128xbf16>,
    %c0_13 = arith.constant 0 : index
    %c0_14 = arith.constant 0 : index
    %12 = vector.load %arg2[%c0_13, %c0_14] : memref<16x128xbf16, #tpu.memory_space<vmem>>, vector<16x128xbf16>
    %c0_15 = arith.constant 0 : index
    %c0_16 = arith.constant 0 : index
    %13 = vector.load %arg8[%c0_15, %c0_16] : memref<128x128xbf16, #tpu.memory_space<vmem>>, vector<128x128xbf16>
    %cst = arith.constant dense<0.000000e+00> : vector<16x128xf32>
    %14 = tpu.matmul %12, %13, %cst {dimension_numbers = #tpu.dot_dimension_numbers<[1], [0], [0], [1], [0, 0, 1, 1], [], []>} : vector<16x128xbf16>, vector<128x128xbf16>, vector<16x128xf32> -> vector<16x128xf32>
    %c0_17 = arith.constant 0 : index
    %c0_18 = arith.constant 0 : index
    %15 = vector.load %arg3[%c0_17, %c0_18] : memref<16x1xf32, #tpu.memory_space<vmem>>, vector<16x1xf32>
    %16 = vector.broadcast %15 : vector<16x1xf32> to vector<16x128xf32>
    %17 = arith.addf %14, %16 : vector<16x128xf32>
    %c0_19 = arith.constant 0 : index
    %c0_20 = arith.constant 0 : index
    %18 = vector.load %arg6[%c0_19, %c0_20] : memref<1x128xf32, #tpu.memory_space<vmem>>, vector<1x128xf32>
    %19 = vector.shape_cast %18 : vector<1x128xf32> to vector<1x128xf32>
    %20 = vector.broadcast %19 : vector<1x128xf32> to vector<16x128xf32>
    %21 = arith.mulf %17, %20 : vector<16x128xf32>
    %cst_21 = arith.constant dense<0.000000e+00> : vector<16xf32>
    %22 = vector.multi_reduction <add>, %21, %cst_21 [1] : vector<16x128xf32> to vector<16xf32>
    %23 = vector.shape_cast %22 : vector<16xf32> to vector<16x1xf32>
    %cst_22 = arith.constant 1.562500e-02 : f32
    %24 = vector.broadcast %cst_22 : f32 to vector<16x1xf32>
    %25 = arith.mulf %23, %24 : vector<16x1xf32>
    %26 = vector.broadcast %25 : vector<16x1xf32> to vector<16x128xf32>
    %27 = arith.subf %17, %26 : vector<16x128xf32>
    %28 = arith.mulf %27, %20 : vector<16x128xf32>
    %29 = arith.mulf %28, %28 : vector<16x128xf32>
    %cst_23 = arith.constant dense<0.000000e+00> : vector<16xf32>
    %30 = vector.multi_reduction <add>, %29, %cst_23 [1] : vector<16x128xf32> to vector<16xf32>
    %31 = vector.shape_cast %30 : vector<16xf32> to vector<16x1xf32>
    %cst_24 = arith.constant 1.562500e-02 : f32
    %32 = vector.broadcast %cst_24 : f32 to vector<16x1xf32>
    %33 = arith.mulf %31, %32 : vector<16x1xf32>
    %cst_25 = arith.constant 9.99999974E-6 : f32
    %34 = vector.broadcast %cst_25 : f32 to vector<16x1xf32>
    %35 = arith.addf %33, %34 : vector<16x1xf32>
    %36 = math.rsqrt %35 : vector<16x1xf32>
    %37 = vector.broadcast %36 : vector<16x1xf32> to vector<16x128xf32>
    %38 = arith.mulf %28, %37 : vector<16x128xf32>
    %cst_26 = arith.constant 0.000000e+00 : f32
    %39 = vector.broadcast %cst_26 : f32 to vector<16x128xf32>
    %40 = arith.cmpf ogt, %38, %39 : vector<16x128xf32>
    %cst_27 = arith.constant 2.000000e-01 : f32
    %41 = vector.broadcast %cst_27 : f32 to vector<16x128xf32>
    %42 = arith.mulf %41, %38 : vector<16x128xf32>
    %43 = arith.select %40, %38, %42 : vector<16x128xi1>, vector<16x128xf32>
    %cst_28 = arith.constant 0.000000e+00 : bf16
    %44 = vector.broadcast %cst_28 : bf16 to vector<16x128xbf16>
    %c0_29 = arith.constant 0 : index
    %c0_30 = arith.constant 0 : index
    %45 = vector.load %arg9[%c0_29, %c0_30] : memref<16x384xbf16, #tpu.memory_space<vmem>>, vector<16x128xbf16>
    tpu.vector_store %arg9[%c0_29, %c0_30], %44 {strides = array<i32>} : memref<16x384xbf16, #tpu.memory_space<vmem>>, vector<16x128xbf16>,
    %cst_31 = arith.constant 0.000000e+00 : bf16
    %46 = vector.broadcast %cst_31 : bf16 to vector<16x128xbf16>
    %c0_32 = arith.constant 0 : index
    %c256 = arith.constant 256 : index
    %47 = vector.load %arg9[%c0_32, %c256] : memref<16x384xbf16, #tpu.memory_space<vmem>>, vector<16x128xbf16>
    tpu.vector_store %arg9[%c0_32, %c256], %46 {strides = array<i32>} : memref<16x384xbf16, #tpu.memory_space<vmem>>, vector<16x128xbf16>,
    %48 = arith.truncf %43 : vector<16x128xf32> to vector<16x128xbf16>
    %c0_33 = arith.constant 0 : index
    %c128 = arith.constant 128 : index
    %49 = vector.load %arg9[%c0_33, %c128] : memref<16x384xbf16, #tpu.memory_space<vmem>>, vector<16x128xbf16>
    tpu.vector_store %arg9[%c0_33, %c128], %48 {strides = array<i32>} : memref<16x384xbf16, #tpu.memory_space<vmem>>, vector<16x128xbf16>,
    %c0_34 = arith.constant 0 : index
    %c111 = arith.constant 111 : index
    %50 = vector.load %arg9[%c0_34, %c111] : memref<16x384xbf16, #tpu.memory_space<vmem>>, vector<16x128xbf16>
    %c0_35 = arith.constant 0 : index
    %c0_36 = arith.constant 0 : index
    %51 = vector.load %arg10[%c0_35, %c0_36] : memref<144x128xbf16, #tpu.memory_space<vmem>>, vector<16x128xbf16>
    tpu.vector_store %arg10[%c0_35, %c0_36], %50 {strides = array<i32>} : memref<144x128xbf16, #tpu.memory_space<vmem>>, vector<16x128xbf16>,
    %c0_37 = arith.constant 0 : index
    %c112 = arith.constant 112 : index
    %52 = vector.load %arg9[%c0_37, %c112] : memref<16x384xbf16, #tpu.memory_space<vmem>>, vector<16x128xbf16>
    %c16_38 = arith.constant 16 : index
    %c0_39 = arith.constant 0 : index
    %53 = vector.load %arg10[%c16_38, %c0_39] : memref<144x128xbf16, #tpu.memory_space<vmem>>, vector<16x128xbf16>
    tpu.vector_store %arg10[%c16_38, %c0_39], %52 {strides = array<i32>} : memref<144x128xbf16, #tpu.memory_space<vmem>>, vector<16x128xbf16>,
    %c0_40 = arith.constant 0 : index
    %c113 = arith.constant 113 : index
    %54 = vector.load %arg9[%c0_40, %c113] : memref<16x384xbf16, #tpu.memory_space<vmem>>, vector<16x128xbf16>
    %c32_41 = arith.constant 32 : index
    %c0_42 = arith.constant 0 : index
    %55 = vector.load %arg10[%c32_41, %c0_42] : memref<144x128xbf16, #tpu.memory_space<vmem>>, vector<16x128xbf16>
    tpu.vector_store %arg10[%c32_41, %c0_42], %54 {strides = array<i32>} : memref<144x128xbf16, #tpu.memory_space<vmem>>, vector<16x128xbf16>,
    %c0_43 = arith.constant 0 : index
    %c127 = arith.constant 127 : index
    %56 = vector.load %arg9[%c0_43, %c127] : memref<16x384xbf16, #tpu.memory_space<vmem>>, vector<16x128xbf16>
    %c48 = arith.constant 48 : index
    %c0_44 = arith.constant 0 : index
    %57 = vector.load %arg10[%c48, %c0_44] : memref<144x128xbf16, #tpu.memory_space<vmem>>, vector<16x128xbf16>
    tpu.vector_store %arg10[%c48, %c0_44], %56 {strides = array<i32>} : memref<144x128xbf16, #tpu.memory_space<vmem>>, vector<16x128xbf16>,
    %c0_45 = arith.constant 0 : index
    %c128_46 = arith.constant 128 : index
    %58 = vector.load %arg9[%c0_45, %c128_46] : memref<16x384xbf16, #tpu.memory_space<vmem>>, vector<16x128xbf16>
    %c64_47 = arith.constant 64 : index
    %c0_48 = arith.constant 0 : index
    %59 = vector.load %arg10[%c64_47, %c0_48] : memref<144x128xbf16, #tpu.memory_space<vmem>>, vector<16x128xbf16>
    tpu.vector_store %arg10[%c64_47, %c0_48], %58 {strides = array<i32>} : memref<144x128xbf16, #tpu.memory_space<vmem>>, vector<16x128xbf16>,
    %c0_49 = arith.constant 0 : index
    %c129 = arith.constant 129 : index
    %60 = vector.load %arg9[%c0_49, %c129] : memref<16x384xbf16, #tpu.memory_space<vmem>>, vector<16x128xbf16>
    %c80 = arith.constant 80 : index
    %c0_50 = arith.constant 0 : index
    %61 = vector.load %arg10[%c80, %c0_50] : memref<144x128xbf16, #tpu.memory_space<vmem>>, vector<16x128xbf16>
    tpu.vector_store %arg10[%c80, %c0_50], %60 {strides = array<i32>} : memref<144x128xbf16, #tpu.memory_space<vmem>>, vector<16x128xbf16>,
    %c0_51 = arith.constant 0 : index
    %c143 = arith.constant 143 : index
    %62 = vector.load %arg9[%c0_51, %c143] : memref<16x384xbf16, #tpu.memory_space<vmem>>, vector<16x128xbf16>
    %c96_52 = arith.constant 96 : index
    %c0_53 = arith.constant 0 : index
    %63 = vector.load %arg10[%c96_52, %c0_53] : memref<144x128xbf16, #tpu.memory_space<vmem>>, vector<16x128xbf16>
    tpu.vector_store %arg10[%c96_52, %c0_53], %62 {strides = array<i32>} : memref<144x128xbf16, #tpu.memory_space<vmem>>, vector<16x128xbf16>,
    %c0_54 = arith.constant 0 : index
    %c144 = arith.constant 144 : index
    %64 = vector.load %arg9[%c0_54, %c144] : memref<16x384xbf16, #tpu.memory_space<vmem>>, vector<16x128xbf16>
    %c112_55 = arith.constant 112 : index
    %c0_56 = arith.constant 0 : index
    %65 = vector.load %arg10[%c112_55, %c0_56] : memref<144x128xbf16, #tpu.memory_space<vmem>>, vector<16x128xbf16>
    tpu.vector_store %arg10[%c112_55, %c0_56], %64 {strides = array<i32>} : memref<144x128xbf16, #tpu.memory_space<vmem>>, vector<16x128xbf16>,
    %c0_57 = arith.constant 0 : index
    %c145 = arith.constant 145 : index
    %66 = vector.load %arg9[%c0_57, %c145] : memref<16x384xbf16, #tpu.memory_space<vmem>>, vector<16x128xbf16>
    %c128_58 = arith.constant 128 : index
    %c0_59 = arith.constant 0 : index
    %67 = vector.load %arg10[%c128_58, %c0_59] : memref<144x128xbf16, #tpu.memory_space<vmem>>, vector<16x128xbf16>
    tpu.vector_store %arg10[%c128_58, %c0_59], %66 {strides = array<i32>} : memref<144x128xbf16, #tpu.memory_space<vmem>>, vector<16x128xbf16>,
    %c0_60 = arith.constant 0 : index
    %c0_61 = arith.constant 0 : index
    %68 = vector.load %arg4[%c0_60, %c0_61] : memref<32x144xbf16, #tpu.memory_space<vmem>>, vector<32x144xbf16>
    %c0_62 = arith.constant 0 : index
    %c0_63 = arith.constant 0 : index
    %69 = vector.load %arg10[%c0_62, %c0_63] : memref<144x128xbf16, #tpu.memory_space<vmem>>, vector<144x128xbf16>
    %cst_64 = arith.constant dense<0.000000e+00> : vector<32x128xf32>
    %70 = tpu.matmul %68, %69, %cst_64 {dimension_numbers = #tpu.dot_dimension_numbers<[1], [0], [0], [1], [0, 0, 1, 1], [], []>} : vector<32x144xbf16>, vector<144x128xbf16>, vector<32x128xf32> -> vector<32x128xf32>
    %c0_65 = arith.constant 0 : index
    %c0_66 = arith.constant 0 : index
    %71 = vector.load %arg5[%c0_65, %c0_66] : memref<32x1xf32, #tpu.memory_space<vmem>>, vector<32x1xf32>
    %72 = vector.broadcast %71 : vector<32x1xf32> to vector<32x128xf32>
    %73 = arith.addf %70, %72 : vector<32x128xf32>
    %74 = vector.shape_cast %18 : vector<1x128xf32> to vector<1x128xf32>
    %75 = vector.broadcast %74 : vector<1x128xf32> to vector<32x128xf32>
    %76 = arith.mulf %73, %75 : vector<32x128xf32>
    %cst_67 = arith.constant dense<0.000000e+00> : vector<32xf32>
    %77 = vector.multi_reduction <add>, %76, %cst_67 [1] : vector<32x128xf32> to vector<32xf32>
    %78 = vector.shape_cast %77 : vector<32xf32> to vector<32x1xf32>
    %79 = vector.extract_strided_slice %78 {offsets = [0, 0], sizes = [8, 1], strides = [1, 1]} : vector<32x1xf32> to vector<8x1xf32>
    %80 = vector.extract_strided_slice %78 {offsets = [8, 0], sizes = [8, 1], strides = [1, 1]} : vector<32x1xf32> to vector<8x1xf32>
    %81 = arith.addf %79, %80 : vector<8x1xf32>
    %82 = vector.extract_strided_slice %78 {offsets = [16, 0], sizes = [8, 1], strides = [1, 1]} : vector<32x1xf32> to vector<8x1xf32>
    %83 = arith.addf %81, %82 : vector<8x1xf32>
    %84 = vector.extract_strided_slice %78 {offsets = [24, 0], sizes = [8, 1], strides = [1, 1]} : vector<32x1xf32> to vector<8x1xf32>
    %85 = arith.addf %83, %84 : vector<8x1xf32>
    %cst_68 = arith.constant 3.906250e-03 : f32
    %86 = vector.broadcast %cst_68 : f32 to vector<8x1xf32>
    %87 = arith.mulf %85, %86 : vector<8x1xf32>
    %88 = tpu.concatenate %87, %87, %87, %87 in 0 : vector<8x1xf32>, vector<8x1xf32>, vector<8x1xf32>, vector<8x1xf32> -> vector<32x1xf32>
    %89 = vector.broadcast %88 : vector<32x1xf32> to vector<32x128xf32>
    %90 = arith.subf %73, %89 : vector<32x128xf32>
    %91 = arith.mulf %90, %75 : vector<32x128xf32>
    %92 = arith.mulf %91, %91 : vector<32x128xf32>
    %cst_69 = arith.constant dense<0.000000e+00> : vector<32xf32>
    %93 = vector.multi_reduction <add>, %92, %cst_69 [1] : vector<32x128xf32> to vector<32xf32>
    %94 = vector.shape_cast %93 : vector<32xf32> to vector<32x1xf32>
    %95 = vector.extract_strided_slice %94 {offsets = [0, 0], sizes = [8, 1], strides = [1, 1]} : vector<32x1xf32> to vector<8x1xf32>
    %96 = vector.extract_strided_slice %94 {offsets = [8, 0], sizes = [8, 1], strides = [1, 1]} : vector<32x1xf32> to vector<8x1xf32>
    %97 = arith.addf %95, %96 : vector<8x1xf32>
    %98 = vector.extract_strided_slice %94 {offsets = [16, 0], sizes = [8, 1], strides = [1, 1]} : vector<32x1xf32> to vector<8x1xf32>
    %99 = arith.addf %97, %98 : vector<8x1xf32>
    %100 = vector.extract_strided_slice %94 {offsets = [24, 0], sizes = [8, 1], strides = [1, 1]} : vector<32x1xf32> to vector<8x1xf32>
    %101 = arith.addf %99, %100 : vector<8x1xf32>
    %cst_70 = arith.constant 3.906250e-03 : f32
    %102 = vector.broadcast %cst_70 : f32 to vector<8x1xf32>
    %103 = arith.mulf %101, %102 : vector<8x1xf32>
    %cst_71 = arith.constant 9.99999974E-6 : f32
    %104 = vector.broadcast %cst_71 : f32 to vector<8x1xf32>
    %105 = arith.addf %103, %104 : vector<8x1xf32>
    %106 = math.rsqrt %105 : vector<8x1xf32>
    %107 = tpu.concatenate %106, %106, %106, %106 in 0 : vector<8x1xf32>, vector<8x1xf32>, vector<8x1xf32>, vector<8x1xf32> -> vector<32x1xf32>
    %108 = vector.broadcast %107 : vector<32x1xf32> to vector<32x128xf32>
    %109 = arith.mulf %91, %108 : vector<32x128xf32>
    %cst_72 = arith.constant 0.000000e+00 : f32
    %110 = vector.broadcast %cst_72 : f32 to vector<32x128xf32>
    %111 = arith.maximumf %109, %110 : vector<32x128xf32>
    %112 = vector.extract_strided_slice %111 {offsets = [0, 0], sizes = [4, 128], strides = [1, 1]} : vector<32x128xf32> to vector<4x128xf32>
    %c0_73 = arith.constant 0 : index
    %c0_74 = arith.constant 0 : index
    %c0_75 = arith.constant 0 : index
    %113 = vector.load %arg7[%c0_73, %c0_74, %c0_75] : memref<1x4x512xf32, #tpu.memory_space<vmem>>, vector<1x4x128xf32>
    %114 = vector.shape_cast %113 : vector<1x4x128xf32> to vector<4x128xf32>
    %115 = vector.shape_cast %112 : vector<4x128xf32> to vector<1x4x128xf32>
    tpu.vector_store %arg7[%c0_73, %c0_74, %c0_75], %115 {strides = array<i32>} : memref<1x4x512xf32, #tpu.memory_space<vmem>>, vector<1x4x128xf32>,
    %116 = vector.extract_strided_slice %111 {offsets = [8, 0], sizes = [4, 128], strides = [1, 1]} : vector<32x128xf32> to vector<4x128xf32>
    %c0_76 = arith.constant 0 : index
    %c0_77 = arith.constant 0 : index
    %c128_78 = arith.constant 128 : index
    %117 = vector.load %arg7[%c0_76, %c0_77, %c128_78] : memref<1x4x512xf32, #tpu.memory_space<vmem>>, vector<1x4x128xf32>
    %118 = vector.shape_cast %117 : vector<1x4x128xf32> to vector<4x128xf32>
    %119 = vector.shape_cast %116 : vector<4x128xf32> to vector<1x4x128xf32>
    tpu.vector_store %arg7[%c0_76, %c0_77, %c128_78], %119 {strides = array<i32>} : memref<1x4x512xf32, #tpu.memory_space<vmem>>, vector<1x4x128xf32>,
    %120 = vector.extract_strided_slice %111 {offsets = [16, 0], sizes = [4, 128], strides = [1, 1]} : vector<32x128xf32> to vector<4x128xf32>
    %c0_79 = arith.constant 0 : index
    %c0_80 = arith.constant 0 : index
    %c256_81 = arith.constant 256 : index
    %121 = vector.load %arg7[%c0_79, %c0_80, %c256_81] : memref<1x4x512xf32, #tpu.memory_space<vmem>>, vector<1x4x128xf32>
    %122 = vector.shape_cast %121 : vector<1x4x128xf32> to vector<4x128xf32>
    %123 = vector.shape_cast %120 : vector<4x128xf32> to vector<1x4x128xf32>
    tpu.vector_store %arg7[%c0_79, %c0_80, %c256_81], %123 {strides = array<i32>} : memref<1x4x512xf32, #tpu.memory_space<vmem>>, vector<1x4x128xf32>,
    %124 = vector.extract_strided_slice %111 {offsets = [24, 0], sizes = [4, 128], strides = [1, 1]} : vector<32x128xf32> to vector<4x128xf32>
    %c0_82 = arith.constant 0 : index
    %c0_83 = arith.constant 0 : index
    %c384 = arith.constant 384 : index
    %125 = vector.load %arg7[%c0_82, %c0_83, %c384] : memref<1x4x512xf32, #tpu.memory_space<vmem>>, vector<1x4x128xf32>
    %126 = vector.shape_cast %125 : vector<1x4x128xf32> to vector<4x128xf32>
    %127 = vector.shape_cast %124 : vector<4x128xf32> to vector<1x4x128xf32>
    tpu.vector_store %arg7[%c0_82, %c0_83, %c384], %127 {strides = array<i32>} : memref<1x4x512xf32, #tpu.memory_space<vmem>>, vector<1x4x128xf32>,
    return
  }
  func.func @transform_0(%arg0: i32) -> (i32, i32, i32) {
    %c0_i32 = arith.constant 0 : i32
    %c0_i32_0 = arith.constant 0 : i32
    %c0_i32_1 = arith.constant 0 : i32
    return %arg0, %c0_i32, %c0_i32_0 : i32, i32, i32
  }
  func.func @transform_1(%arg0: i32) -> (i32, i32) {
    %c0_i32 = arith.constant 0 : i32
    %c0_i32_0 = arith.constant 0 : i32
    %c0_i32_1 = arith.constant 0 : i32
    return %c0_i32, %c0_i32_0 : i32, i32
  }
  func.func @transform_2(%arg0: i32) -> (i32, i32) {
    %c0_i32 = arith.constant 0 : i32
    %c0_i32_0 = arith.constant 0 : i32
    %c0_i32_1 = arith.constant 0 : i32
    return %c0_i32, %c0_i32_0 : i32, i32
  }
  func.func @transform_3(%arg0: i32) -> (i32, i32) {
    %c0_i32 = arith.constant 0 : i32
    %c0_i32_0 = arith.constant 0 : i32
    %c0_i32_1 = arith.constant 0 : i32
    return %c0_i32, %c0_i32_0 : i32, i32
  }
  func.func @transform_4(%arg0: i32) -> (i32, i32) {
    %c0_i32 = arith.constant 0 : i32
    %c0_i32_0 = arith.constant 0 : i32
    %c0_i32_1 = arith.constant 0 : i32
    return %c0_i32, %c0_i32_0 : i32, i32
  }
  func.func @transform_5(%arg0: i32) -> (i32, i32) {
    %c0_i32 = arith.constant 0 : i32
    %c0_i32_0 = arith.constant 0 : i32
    %c0_i32_1 = arith.constant 0 : i32
    return %c0_i32, %c0_i32_0 : i32, i32
  }
  func.func @transform_6(%arg0: i32) -> (i32, i32, i32) {
    %c0_i32 = arith.constant 0 : i32
    %c0_i32_0 = arith.constant 0 : i32
    %c0_i32_1 = arith.constant 0 : i32
    return %arg0, %c0_i32, %c0_i32_0 : i32, i32, i32
  }
}

</mosaic_0001>

<llo_original>
// kernel: tile.8
$region0: #{tile.8}
  #allocation0 [shape = 's32[1]{0}', space=sflag, size = 0x4, scoped, tag = 'scoped memory for tile.8']
  %s0 = inlined_call_operand.vmem [shape: f32[8], index: 0, kind: input, shape index: {}]
  %s1 = inlined_call_operand.vmem [shape: f32[4,8], index: 1, kind: output, shape index: {}]
  // Predicated region
  $region2: #{tile.8} parent=0 // pred_check
    _
  $region3: #{tile.8} parent=0 // pred_check_branch
    %3 = sbr.rel (0) target = $region5
  $region4: #{tile.8} parent=0 // pred_region
    _
  $region5: #{tile.8} parent=0 // pred_fallthru
    _
  %v4 = vld [vmem:[%s0] ss:$0 sm:$0xff]
  %5 = vst [vmem:[%s1] sm:$0xf] %v4

// kernel: tile.0
$region0: #{tile.0}
  %s0 = inlined_call_operand.vmem [shape: f32[4,8], index: 0, kind: input, shape index: {}]
  %s1 = inlined_call_operand.vmem [shape: f32[32,1], index: 1, kind: output, shape index: {}]
  $region1: #{tile.0} parent=0
    #allocation0 [shape = 'u8[4096]{0}', space=vmem, size = 0x1000, scoped, tag = 'scoped mem for input reshape']
    %s3 = sshllo.u32 0, 4
    %v4 = vld [vmem:[%s0] sm:%s3]
    %5 = vst [vmem:[#allocation0] sm:%s3] %v4
    %v6 = vld [vmem:[#allocation0] sm:$0xf]
    %vm7 = vcmask 7168
    %8 = vst.msk [vmem:[%s1] ss:$8 sm:$0xf] %vm7, %v6
    %v9 = vld [vmem:[#allocation0] sm:$0xf]
    %10 = vrot.lane.b32.xlu0 %v9, 127
    %v11 = vpop.permute.xlu0 %10
    %vm12 = vcmask 7168
    %s13 = scalar_lea.vmem %s1, 1
    %14 = vst.msk [vmem:[%s13] ss:$8 sm:$0xf] %vm12, %v11
    %v15 = vld [vmem:[#allocation0] sm:$0xf]
    %16 = vrot.lane.b32.xlu0 %v15, 126
    %v17 = vpop.permute.xlu0 %16
    %vm18 = vcmask 7168
    %s19 = scalar_lea.vmem %s1, 2
    %20 = vst.msk [vmem:[%s19] ss:$8 sm:$0xf] %vm18, %v17
    %v21 = vld [vmem:[#allocation0] sm:$0xf]
    %22 = vrot.lane.b32.xlu0 %v21, 125
    %v23 = vpop.permute.xlu0 %22
    %vm24 = vcmask 7168
    %s25 = scalar_lea.vmem %s1, 3
    %26 = vst.msk [vmem:[%s25] ss:$8 sm:$0xf] %vm24, %v23
    %v27 = vld [vmem:[#allocation0] sm:$0xf]
    %28 = vrot.lane.b32.xlu0 %v27, 124
    %v29 = vpop.permute.xlu0 %28
    %vm30 = vcmask 7168
    %s31 = scalar_lea.vmem %s1, 4
    %32 = vst.msk [vmem:[%s31] ss:$8 sm:$0xf] %vm30, %v29
    %v33 = vld [vmem:[#allocation0] sm:$0xf]
    %34 = vrot.lane.b32.xlu0 %v33, 123
    %v35 = vpop.permute.xlu0 %34
    %vm36 = vcmask 7168
    %s37 = scalar_lea.vmem %s1, 5
    %38 = vst.msk [vmem:[%s37] ss:$8 sm:$0xf] %vm36, %v35
    %v39 = vld [vmem:[#allocation0] sm:$0xf]
    %40 = vrot.lane.b32.xlu0 %v39, 122
    %v41 = vpop.permute.xlu0 %40
    %vm42 = vcmask 7168
    %s43 = scalar_lea.vmem %s1, 6
    %44 = vst.msk [vmem:[%s43] ss:$8 sm:$0xf] %vm42, %v41
    %v45 = vld [vmem:[#allocation0] sm:$0xf]
    %46 = vrot.lane.b32.xlu0 %v45, 121
    %v47 = vpop.permute.xlu0 %46
    %vm48 = vcmask 7168
    %s49 = scalar_lea.vmem %s1, 7
    %50 = vst.msk [vmem:[%s49] ss:$8 sm:$0xf] %vm48, %v47

// kernel: unet_module_forward.1
$region0: #{unet_module_forward.1}
  #allocation0 [shape = 'u32[]', space=smem, size = 0x4, offset = 0x4, fixed_abs, tag = 'smem constant byte address 0x4 - core index']
  #allocation1 [shape = 'u32[144,128]{1,0:T(1,128)}', space=vmem, size = 0x12000, scoped, tag = 'internal scratch']
  #allocation2 [shape = 'bf16[128,128]{1,0:T(16,128)(2,1)}', space=vmem, size = 0x8000, scoped, tag = 'scratch operand']
  #allocation3 [shape = 'bf16[16,384]{1,0:T(16,128)(2,1)}', space=vmem, size = 0x3000, scoped, tag = 'scratch operand']
  #allocation4 [shape = 'bf16[144,128]{1,0:T(16,128)(2,1)}', space=vmem, size = 0x9000, scoped, tag = 'scratch operand']
  %s0 = inlined_call_operand.vmem [shape: bf16[2,32,160], index: 0, kind: input, shape index: {}]
  %s1 = inlined_call_operand.vmem [shape: bf16[16,128], index: 1, kind: input, shape index: {}]
  %s2 = inlined_call_operand.vmem [shape: f32[16,1], index: 2, kind: input, shape index: {}]
  %s3 = inlined_call_operand.vmem [shape: bf16[32,144], index: 3, kind: input, shape index: {}]
  %s4 = inlined_call_operand.vmem [shape: f32[32,1], index: 4, kind: input, shape index: {}]
  %s5 = inlined_call_operand.vmem [shape: f32[1,128], index: 5, kind: input, shape index: {}]
  %s6 = inlined_call_operand.vmem [shape: f32[2,4,512], index: 6, kind: output, shape index: {}]
  %s7 = sld [smem:[#allocation0]]
  $region57: #{unet_module_forward.1} parent=0
    _
  %s9 = ssub.s32 1, %s7
  %s10 = scalar_select 0, %s9, %s7
  loop: start=0, step=1, limit=4
  $region2: #{unet_module_forward.1} parent=0 // loop_pre_header
    _
  $region3: #{unet_module_forward.1} parent=0 // loop_header
    %s12 = sphi 0, %s16
    %p13 = scmp.ge.s32.totalorder %s12, 4
    %s22 = sphi 0, %s24
    %s25 = sphi 0, %s22
    %s26 = sphi 0, %s25
    %s42 = sphi 0, %s26
    %s46 = sphi 0, %s46
    %s48 = sphi 0, %s46
    %s49 = sphi 0, %s48
    %s63 = sphi 0, %s49
    %s67 = sphi 0, %s67
    %s69 = sphi 0, %s67
    %s70 = sphi 0, %s69
    %s84 = sphi 0, %s70
    %s88 = sphi 0, %s88
    %s90 = sphi 0, %s88
    %s91 = sphi 0, %s90
    %s105 = sphi 0, %s91
    %s109 = sphi 0, %s109
    %s111 = sphi 0, %s109
    %s112 = sphi 0, %s111
    %s126 = sphi 0, %s112
    %s130 = sphi 0, %s130
    %s132 = sphi 0, %s130
    %s133 = sphi 0, %s132
    %s147 = sphi 0, %s133
    %s153 = sphi 0, %s155
    %s156 = sphi 0, %s153
    %s157 = sphi 0, %s156
    %s173 = sphi 0, %s157
  $region4: #{unet_module_forward.1} parent=0 // loop_header_branch
    %15 = sbr.rel (%p13) target = $region8
  $region5: #{unet_module_forward.1} parent=0 // loop_body
    %s17 = ssub.s32 %s12, 1
    %s18 = ssub.s32 %s12, 2
    %s19 = sadd.s32 %s12, 1
    %s20 = ssub.s32 %s12, %s19
    %p21 = scmp.eq.s32.totalorder %s20, 0
    %s23 = sadd.s32 %s22, 1
    %s24 = scalar_select %p21, %s22, %s23
    %p27 = pneg %p21
    %p28 = scmp.eq.s32.totalorder %s12, 1
    %p29 = por %p27, %p28
    %p30 = scmp.ne.s32.totalorder %s22, %s25
    %p31 = scmp.eq.s32.totalorder %s12, 0
    %p32 = por %p30, %p31
    %p33 = scmp.ne.s32.totalorder %s22, %s25
    %p34 = scmp.eq.s32.totalorder %s17, 1
    %p35 = por %p33, %p34
    %p36 = scmp.ne.s32.totalorder %s25, %s26
    %p37 = scmp.eq.s32.totalorder %s17, 0
    %p38 = por %p36, %p37
    %p39 = scmp.ne.s32.totalorder %s25, %s26
    %p40 = scmp.eq.s32.totalorder %s18, 1
    %p41 = por %p39, %p40
    %p43 = scmp.ne.s32.totalorder %s26, %s42
    %p44 = scmp.eq.s32.totalorder %s18, 0
    %p45 = por %p43, %p44
    %s47 = sadd.s32 %s46, 1
    %p50 = scmp.eq.s32.totalorder %s12, 1
    %p51 = scmp.ne.s32.totalorder %s46, %s48
    %p52 = scmp.eq.s32.totalorder %s12, 0
    %p53 = por %p51, %p52
    %p54 = scmp.ne.s32.totalorder %s46, %s48
    %p55 = scmp.eq.s32.totalorder %s17, 1
    %p56 = por %p54, %p55
    %p57 = scmp.ne.s32.totalorder %s48, %s49
    %p58 = scmp.eq.s32.totalorder %s17, 0
    %p59 = por %p57, %p58
    %p60 = scmp.ne.s32.totalorder %s48, %s49
    %p61 = scmp.eq.s32.totalorder %s18, 1
    %p62 = por %p60, %p61
    %p64 = scmp.ne.s32.totalorder %s49, %s63
    %p65 = scmp.eq.s32.totalorder %s18, 0
    %p66 = por %p64, %p65
    %s68 = sadd.s32 %s67, 1
    %p71 = scmp.eq.s32.totalorder %s12, 1
    %p72 = scmp.ne.s32.totalorder %s67, %s69
    %p73 = scmp.eq.s32.totalorder %s12, 0
    %p74 = por %p72, %p73
    %p75 = scmp.ne.s32.totalorder %s67, %s69
    %p76 = scmp.eq.s32.totalorder %s17, 1
    %p77 = por %p75, %p76
    %p78 = scmp.ne.s32.totalorder %s69, %s70
    %p79 = scmp.eq.s32.totalorder %s17, 0
    %p80 = por %p78, %p79
    %p81 = scmp.ne.s32.totalorder %s69, %s70
    %p82 = scmp.eq.s32.totalorder %s18, 1
    %p83 = por %p81, %p82
    %p85 = scmp.ne.s32.totalorder %s70, %s84
    %p86 = scmp.eq.s32.totalorder %s18, 0
    %p87 = por %p85, %p86
    %s89 = sadd.s32 %s88, 1
    %p92 = scmp.eq.s32.totalorder %s12, 1
    %p93 = scmp.ne.s32.totalorder %s88, %s90
    %p94 = scmp.eq.s32.totalorder %s12, 0
    %p95 = por %p93, %p94
    %p96 = scmp.ne.s32.totalorder %s88, %s90
    %p97 = scmp.eq.s32.totalorder %s17, 1
    %p98 = por %p96, %p97
    %p99 = scmp.ne.s32.totalorder %s90, %s91
    %p100 = scmp.eq.s32.totalorder %s17, 0
    %p101 = por %p99, %p100
    %p102 = scmp.ne.s32.totalorder %s90, %s91
    %p103 = scmp.eq.s32.totalorder %s18, 1
    %p104 = por %p102, %p103
    %p106 = scmp.ne.s32.totalorder %s91, %s105
    %p107 = scmp.eq.s32.totalorder %s18, 0
    %p108 = por %p106, %p107
    %s110 = sadd.s32 %s109, 1
    %p113 = scmp.eq.s32.totalorder %s12, 1
    %p114 = scmp.ne.s32.totalorder %s109, %s111
    %p115 = scmp.eq.s32.totalorder %s12, 0
    %p116 = por %p114, %p115
    %p117 = scmp.ne.s32.totalorder %s109, %s111
    %p118 = scmp.eq.s32.totalorder %s17, 1
    %p119 = por %p117, %p118
    %p120 = scmp.ne.s32.totalorder %s111, %s112
    %p121 = scmp.eq.s32.totalorder %s17, 0
    %p122 = por %p120, %p121
    %p123 = scmp.ne.s32.totalorder %s111, %s112
    %p124 = scmp.eq.s32.totalorder %s18, 1
    %p125 = por %p123, %p124
    %p127 = scmp.ne.s32.totalorder %s112, %s126
    %p128 = scmp.eq.s32.totalorder %s18, 0
    %p129 = por %p127, %p128
    %s131 = sadd.s32 %s130, 1
    %p134 = scmp.eq.s32.totalorder %s12, 1
    %p135 = scmp.ne.s32.totalorder %s130, %s132
    %p136 = scmp.eq.s32.totalorder %s12, 0
    %p137 = por %p135, %p136
    %p138 = scmp.ne.s32.totalorder %s130, %s132
    %p139 = scmp.eq.s32.totalorder %s17, 1
    %p140 = por %p138, %p139
    %p141 = scmp.ne.s32.totalorder %s132, %s133
    %p142 = scmp.eq.s32.totalorder %s17, 0
    %p143 = por %p141, %p142
    %p144 = scmp.ne.s32.totalorder %s132, %s133
    %p145 = scmp.eq.s32.totalorder %s18, 1
    %p146 = por %p144, %p145
    %p148 = scmp.ne.s32.totalorder %s133, %s147
    %p149 = scmp.eq.s32.totalorder %s18, 0
    %p150 = por %p148, %p149
    %s151 = ssub.s32 %s12, %s19
    %p152 = scmp.eq.s32.totalorder %s151, 0
    %s154 = sadd.s32 %s153, 1
    %s155 = scalar_select %p152, %s153, %s154
    %p158 = pneg %p152
    %p159 = scmp.eq.s32.totalorder %s12, 1
    %p160 = por %p158, %p159
    %p161 = scmp.ne.s32.totalorder %s153, %s156
    %p162 = scmp.eq.s32.totalorder %s12, 0
    %p163 = por %p161, %p162
    %p164 = scmp.ne.s32.totalorder %s153, %s156
    %p165 = scmp.eq.s32.totalorder %s17, 1
    %p166 = por %p164, %p165
    %p167 = scmp.ne.s32.totalorder %s156, %s157
    %p168 = scmp.eq.s32.totalorder %s17, 0
    %p169 = por %p167, %p168
    %p170 = scmp.ne.s32.totalorder %s156, %s157
    %p171 = scmp.eq.s32.totalorder %s18, 1
    %p172 = por %p170, %p171
    %p174 = scmp.ne.s32.totalorder %s157, %s173
    %p175 = scmp.eq.s32.totalorder %s18, 0
    %p176 = por %p174, %p175
    %p177 = scmp.le.s32.totalorder 1, %s12
    %p178 = scmp.lt.s32.totalorder %s12, 3
    %p179 = pnand %p177, %p178
    %p180 = pneg %p179
    // Predicated region
    $region9: #{unet_module_forward.1} parent=5 // pred_check
      _
    $region10: #{unet_module_forward.1} parent=5 // pred_check_branch
      %182 = sbr.rel (%p179) target = $region12
    $region11: #{unet_module_forward.1} parent=5 // pred_region
      %s183 = ssub.s32 %s12, 1
      // Predicated region
      $region13: #{unet_module_forward.1} parent=11 // pred_check
        %p184 = pneg %p59
      $region14: #{unet_module_forward.1} parent=11 // pred_check_branch
        %186 = sbr.rel (%p184) target = $region16
      $region15: #{unet_module_forward.1} parent=11 // pred_region
        _
      $region16: #{unet_module_forward.1} parent=11 // pred_fallthru
        _
      // Predicated region
      $region17: #{unet_module_forward.1} parent=11 // pred_check
        %p187 = pneg %p80
      $region18: #{unet_module_forward.1} parent=11 // pred_check_branch
        %189 = sbr.rel (%p187) target = $region20
      $region19: #{unet_module_forward.1} parent=11 // pred_region
        _
      $region20: #{unet_module_forward.1} parent=11 // pred_fallthru
        _
      // Predicated region
      $region21: #{unet_module_forward.1} parent=11 // pred_check
        %p190 = pneg %p101
      $region22: #{unet_module_forward.1} parent=11 // pred_check_branch
        %192 = sbr.rel (%p190) target = $region24
      $region23: #{unet_module_forward.1} parent=11 // pred_region
        _
      $region24: #{unet_module_forward.1} parent=11 // pred_fallthru
        _
      // Predicated region
      $region25: #{unet_module_forward.1} parent=11 // pred_check
        %p193 = pneg %p122
      $region26: #{unet_module_forward.1} parent=11 // pred_check_branch
        %195 = sbr.rel (%p193) target = $region28
      $region27: #{unet_module_forward.1} parent=11 // pred_region
        _
      $region28: #{unet_module_forward.1} parent=11 // pred_fallthru
        _
      // Predicated region
      $region29: #{unet_module_forward.1} parent=11 // pred_check
        %p196 = pneg %p143
      $region30: #{unet_module_forward.1} parent=11 // pred_check_branch
        %198 = sbr.rel (%p196) target = $region32
      $region31: #{unet_module_forward.1} parent=11 // pred_region
        _
      $region32: #{unet_module_forward.1} parent=11 // pred_fallthru
        _
    $region12: #{unet_module_forward.1} parent=5 // pred_fallthru
      _
    %p199 = scmp.lt.s32.totalorder %s12, 2
    // Predicated region
    $region33: #{unet_module_forward.1} parent=5 // pred_check
      %p200 = pneg %p199
    $region34: #{unet_module_forward.1} parent=5 // pred_check_branch
      %202 = sbr.rel (%p200) target = $region36
    $region35: #{unet_module_forward.1} parent=5 // pred_region
      // Predicated region
      $region37: #{unet_module_forward.1} parent=35 // pred_check
        %p203 = pneg %p32
      $region38: #{unet_module_forward.1} parent=35 // pred_check_branch
        %205 = sbr.rel (%p203) target = $region40
      $region39: #{unet_module_forward.1} parent=35 // pred_region
        %p206 = scmp.lt.s32.totalorder %s12, 1
        %s207 = scalar_select %p206, %s12, 1
        %s208 = smul.addr %s207, 8
        %s209 = smul.addr %s208, 4
        %s210 = scalar_lea.vmem %s0, %s209
      $region40: #{unet_module_forward.1} parent=35 // pred_fallthru
        _
    $region36: #{unet_module_forward.1} parent=5 // pred_fallthru
      _
    %p211 = scmp.le.s32.totalorder 1, %s12
    %p212 = scmp.lt.s32.totalorder %s12, 3
    %p213 = pnand %p211, %p212
    %p214 = pneg %p213
    // Predicated region
    $region41: #{unet_module_forward.1} parent=5 // pred_check
      _
    $region42: #{unet_module_forward.1} parent=5 // pred_check_branch
      %216 = sbr.rel (%p213) target = $region44
    $region43: #{unet_module_forward.1} parent=5 // pred_region
      %s217 = ssub.s32 %s12, 1
      %p218 = scmp.lt.s32.totalorder %s17, 1
      %s219 = scalar_select %p218, %s17, 1
      %s220 = smul.addr %s219, 8
      %s221 = smul.addr %s220, 4
      %s222 = scalar_lea.vmem %s0, %s221
      %p223 = pneg %p38
      %p224 = pneg %p35
      %p225 = pneg %p59
      %p226 = pneg %p56
      %p227 = pneg %p80
      %p228 = pneg %p77
      %p229 = pneg %p101
      %p230 = pneg %p98
      %p231 = pneg %p122
      %p232 = pneg %p119
      %p233 = pneg %p143
      %p234 = pneg %p140
      %p235 = pneg %p169
      %p236 = pneg %p166
      %p237 = scmp.lt.s32.totalorder %s17, 1
      %s238 = scalar_select %p237, %s17, 1
      %s239 = smul.addr %s238, 4
      %s240 = smul.addr %s239, 4
      %s241 = scalar_lea.vmem %s6, %s240
      %p242 = scmp.lt.s32.totalorder %s17, 1
      %s243 = scalar_select %p242, %s17, 1
      %s244 = smul.addr %s243, 8
      %s245 = smul.addr %s244, 4
      %s246 = scalar_lea.vmem %s0, %s245
      %p247 = scmp.lt.s32.totalorder %s17, 1
      %s248 = scalar_select %p247, %s17, 1
      %s249 = smul.addr %s248, 4
      %s250 = smul.addr %s249, 4
      %s251 = scalar_lea.vmem %s6, %s250
      %v253 = vld [vmem:[%s246] sm:$0xf]
      %v254 = vld [vmem:[%s246 + $0x8] sm:$0xf]
      %v255 = vld [vmem:[%s246 + $0x10] sm:$0xf]
      %v256 = vld [vmem:[%s246 + $0x18] sm:$0xf]
      %v261 = vunpack.c.l.b16 %v253
      %v262 = vunpack.c.l.b16 %v254
      %v263 = vunpack.c.l.b16 %v255
      %v264 = vunpack.c.l.b16 %v256
      %v265 = vpack.c.b16 %v262, %v261
      %v266 = vpack.c.b16 %v264, %v263
      %269 = vst [vmem:[#allocation2] sm:$0xff] %v265
      %270 = vst [vmem:[#allocation2 + $0x8] sm:$0xff] %v266
      %v271 = vld [vmem:[%s246] sm:$0xff]
      %v272 = vld [vmem:[%s246 + $0x8] sm:$0xff]
      %v273 = vld [vmem:[%s246 + $0x10] sm:$0xff]
      %v274 = vld [vmem:[%s246 + $0x18] sm:$0xff]
      %v279 = vunpack.c.l.b16 %v271
      %v280 = vunpack.c.h.b16 %v271
      %v281 = vunpack.c.l.b16 %v272
      %v282 = vunpack.c.h.b16 %v272
      %v283 = vunpack.c.l.b16 %v273
      %v284 = vunpack.c.h.b16 %v273
      %v285 = vunpack.c.l.b16 %v274
      %v286 = vunpack.c.h.b16 %v274
      %v287 = vpack.c.b16 %v281, %v279
      %v288 = vpack.c.b16 %v282, %v280
      %v289 = vpack.c.b16 %v285, %v283
      %v290 = vpack.c.b16 %v286, %v284
      %291 = vrot.lane.b32.xlu0 %v287, 127
      %v292 = vpop.permute.xlu0 %291
      %293 = vrot.lane.b32.xlu0 %v288, 127
      %v294 = vpop.permute.xlu0 %293
      %295 = vrot.lane.b32.xlu0 %v289, 127
      %v296 = vpop.permute.xlu0 %295
      %297 = vrot.lane.b32.xlu0 %v290, 127
      %v298 = vpop.permute.xlu0 %297
      %vm299 = vcmask 1039360
      %v300 = vsel %vm299, %v292, %v294
      %v301 = vsel %vm299, %v296, %v298
      %304 = vst [vmem:[#allocation2 + $0x10] sm:$0xff] %v300
      %305 = vst [vmem:[#allocation2 + $0x18] sm:$0xff] %v301
      %v306 = vld [vmem:[%s246] sm:$0xff]
      %v307 = vld [vmem:[%s246 + $0x8] sm:$0xff]
      %v308 = vld [vmem:[%s246 + $0x10] sm:$0xff]
      %v309 = vld [vmem:[%s246 + $0x18] sm:$0xff]
      %v314 = vunpack.c.l.b16 %v306
      %v315 = vunpack.c.h.b16 %v306
      %v316 = vunpack.c.l.b16 %v307
      %v317 = vunpack.c.h.b16 %v307
      %v318 = vunpack.c.l.b16 %v308
      %v319 = vunpack.c.h.b16 %v308
      %v320 = vunpack.c.l.b16 %v309
      %v321 = vunpack.c.h.b16 %v309
      %v322 = vpack.c.b16 %v316, %v314
      %v323 = vpack.c.b16 %v317, %v315
      %v324 = vpack.c.b16 %v320, %v318
      %v325 = vpack.c.b16 %v321, %v319
      %326 = vrot.lane.b32.xlu0 %v322, 112
      %v327 = vpop.permute.xlu0 %326
      %328 = vrot.lane.b32.xlu0 %v323, 112
      %v329 = vpop.permute.xlu0 %328
      %330 = vrot.lane.b32.xlu0 %v324, 112
      %v331 = vpop.permute.xlu0 %330
      %332 = vrot.lane.b32.xlu0 %v325, 112
      %v333 = vpop.permute.xlu0 %332
      %vm334 = vcmask 916480
      %v335 = vsel %vm334, %v327, %v329
      %v336 = vsel %vm334, %v331, %v333
      %339 = vst [vmem:[#allocation2 + $0x20] sm:$0xff] %v335
      %340 = vst [vmem:[#allocation2 + $0x28] sm:$0xff] %v336
      %v341 = vld [vmem:[%s246] sm:$0xff]
      %v342 = vld [vmem:[%s246 + $0x8] sm:$0xff]
      %v343 = vld [vmem:[%s246 + $0x10] sm:$0xff]
      %v344 = vld [vmem:[%s246 + $0x18] sm:$0xff]
      %v349 = vunpack.c.l.b16 %v341
      %v350 = vunpack.c.h.b16 %v341
      %v351 = vunpack.c.l.b16 %v342
      %v352 = vunpack.c.h.b16 %v342
      %v353 = vunpack.c.l.b16 %v343
      %v354 = vunpack.c.h.b16 %v343
      %v355 = vunpack.c.l.b16 %v344
      %v356 = vunpack.c.h.b16 %v344
      %v357 = vpack.c.b16 %v351, %v349
      %v358 = vpack.c.b16 %v352, %v350
      %v359 = vpack.c.b16 %v355, %v353
      %v360 = vpack.c.b16 %v356, %v354
      %361 = vrot.lane.b32.xlu0 %v357, 111
      %v362 = vpop.permute.xlu0 %361
      %363 = vrot.lane.b32.xlu0 %v358, 111
      %v364 = vpop.permute.xlu0 %363
      %365 = vrot.lane.b32.xlu0 %v359, 111
      %v366 = vpop.permute.xlu0 %365
      %367 = vrot.lane.b32.xlu0 %v360, 111
      %v368 = vpop.permute.xlu0 %367
      %vm369 = vcmask 908288
      %v370 = vsel %vm369, %v362, %v364
      %v371 = vsel %vm369, %v366, %v368
      %374 = vst [vmem:[#allocation2 + $0x30] sm:$0xff] %v370
      %375 = vst [vmem:[#allocation2 + $0x38] sm:$0xff] %v371
      %v376 = vld [vmem:[%s1] sm:$0xf]
      %v377 = vld [vmem:[%s1 + $0x4] sm:$0xf]
      %v378 = vld [vmem:[#allocation2] sm:$0xff]
      %v379 = vld [vmem:[#allocation2 + $0x8] sm:$0xff]
      %v380 = vld [vmem:[#allocation2 + $0x10] sm:$0xff]
      %v381 = vld [vmem:[#allocation2 + $0x18] sm:$0xff]
      %v382 = vld [vmem:[#allocation2 + $0x20] sm:$0xff]
      %v383 = vld [vmem:[#allocation2 + $0x28] sm:$0xff]
      %v384 = vld [vmem:[#allocation2 + $0x30] sm:$0xff]
      %v385 = vld [vmem:[#allocation2 + $0x38] sm:$0xff]
      %v386 = vld [vmem:[%s2] sm:$0xff]
      %v387 = vld [vmem:[%s2 + $0x8] sm:$0xff]
      %389 = vset.pattern.permute.xlu0 0
      %390 = vperm.xlu0 %389, %v386
      %v391 = vpop.permute.xlu0 %390
      %394 = vset.pattern.permute.xlu0 0
      %395 = vperm.xlu0 %394, %v387
      %v396 = vpop.permute.xlu0 %395
      %v400 = vunpack.c.l.b16 %v376
      %v401 = vunpack.c.l.b16 %v377
      %v402 = vpack.c.b16 %v401, %v400
      %404 = vmatprep.subr.bf16.mxu0 0
      %405 = vmatpush1.bf16.msra.mxu0 %v378
      %406 = vmatprep.subr.bf16.mxu0 0
      %407 = vmatpush1.bf16.msra.mxu0 %v379
      %408 = vmatprep.subr.bf16.mxu0 0
      %409 = vmatpush1.bf16.msra.mxu0 %v380
      %410 = vmatprep.subr.bf16.mxu0 0
      %411 = vmatpush1.bf16.msra.mxu0 %v381
      %412 = vmatprep.subr.bf16.mxu0 0
      %413 = vmatpush1.bf16.msra.mxu0 %v382
      %414 = vmatprep.subr.bf16.mxu0 0
      %415 = vmatpush1.bf16.msra.mxu0 %v383
      %416 = vmatprep.subr.bf16.mxu0 0
      %417 = vmatpush1.bf16.msra.mxu0 %v384
      %418 = vmatprep.subr.bf16.mxu0 0
      %419 = vmatpush1.bf16.msra.mxu0 %v385
      %420 = vmatprep.subr.bf16.mxu0 0
      %421 = vmatpush1.bf16.msra.mxu0 0
      %422 = vmatprep.subr.bf16.mxu0 0
      %423 = vmatpush1.bf16.msra.mxu0 0
      %424 = vmatprep.subr.bf16.mxu0 0
      %425 = vmatpush1.bf16.msra.mxu0 0
      %426 = vmatprep.subr.bf16.mxu0 0
      %427 = vmatpush1.bf16.msra.mxu0 0
      %428 = vmatprep.subr.bf16.mxu0 0
      %429 = vmatpush1.bf16.msra.mxu0 0
      %430 = vmatprep.subr.bf16.mxu0 0
      %431 = vmatpush1.bf16.msra.mxu0 0
      %432 = vmatprep.subr.bf16.mxu0 0
      %433 = vmatpush1.bf16.msra.mxu0 0
      %434 = vmatprep.subr.bf16.mxu0 0
      %435 = vmatpush1.bf16.msra.mxu0 0
      %436 = vmatprep.mubr.bf16.mxu0 0
      %437 = vmatmul.mubr.bf16.gmra.mrb[0].mxu0 %v402
      %v438 = vpop.f32.mrb[0].mxu0
      %v439 = vadd.f32 %v391, %v438
      %v440 = vpop.f32.mrb[0].mxu0
      %v441 = vpop.f32.mrb[0].mxu0
      %v442 = vadd.f32 %v396, %v441
      %v443 = vpop.f32.mrb[0].mxu0
      %444 = vdwg.mxu0
      %v445 = vld [vmem:[%s5] sm:$0x1]
      %v447 = vlaneseq
      %v448 = vshrl.u32 %v447, 7
      %v449 = vsub.s32 0, %v448
      %v450 = vrot.slane %v445, %v449
      %v452 = vmul.f32 %v439, %v450
      %v453 = vmul.f32 %v442, %v450
      %454 = vadd.xlane.f32.xlu0 %v452
      %v455 = vpop.xlane.xlu0 %454
      %456 = vadd.xlane.f32.xlu0 %v453
      %v457 = vpop.xlane.xlu0 %456
      %v458 = vmul.f32 %v455, 0.015625
      %v459 = vmul.f32 %v457, 0.015625
      %v460 = vsub.f32 %v439, %v458
      %v461 = vsub.f32 %v442, %v459
      %v462 = vmul.f32 %v460, %v450
      %v463 = vmul.f32 %v461, %v450
      %v464 = vmul.f32 %v462, %v462
      %v465 = vmul.f32 %v463, %v463
      %466 = vadd.xlane.f32.xlu0 %v464
      %v467 = vpop.xlane.xlu0 %466
      %468 = vadd.xlane.f32.xlu0 %v465
      %v469 = vpop.xlane.xlu0 %468
      %v470 = vmul.f32 %v467, 0.015625
      %v471 = vmul.f32 %v469, 0.015625
      %v472 = vadd.f32 %v470, 1e-05
      %v473 = vadd.f32 %v471, 1e-05
      %v474 = vrsqrt.pop %v472
      %v475 = vrsqrt.pop %v473
      %v476 = vmul.f32 %v462, %v474
      %v477 = vmul.f32 %v463, %v475
      %vm478 = vcmp.gt.f32.partialorder %v476, 0.0
      %vm479 = vcmp.gt.f32.partialorder %v477, 0.0
      %v480 = vmul.f32 %v476, 0.2
      %v481 = vmul.f32 %v477, 0.2
      %v482 = vsel %vm478, %v476, %v480
      %v483 = vsel %vm479, %v477, %v481
      %484 = vst [vmem:[#allocation3] sm:$0xff] 0
      %485 = vst [vmem:[#allocation3 + $0x10] sm:$0xff] 0
      %v486 = vpack.c.bf16 %v483, %v482
      %487 = vst [vmem:[#allocation3 + $0x8] sm:$0xff] %v486
      %v488 = vld [vmem:[#allocation3] sm:$0xff]
      %v489 = vld [vmem:[#allocation3 + $0x8] sm:$0xff]
      %492 = vrot.lane.b32.xlu0 %v488, 17
      %v493 = vpop.permute.xlu0 %492
      %494 = vrot.lane.b32.xlu0 %v489, 17
      %v495 = vpop.permute.xlu0 %494
      %vm496 = vcmask 138240
      %v497 = vsel %vm496, %v493, %v495
      %499 = vst [vmem:[#allocation4] sm:$0xff] %v497
      %v500 = vld [vmem:[#allocation3] sm:$0xff]
      %v501 = vld [vmem:[#allocation3 + $0x8] sm:$0xff]
      %504 = vrot.lane.b32.xlu0 %v500, 16
      %v505 = vpop.permute.xlu0 %504
      %506 = vrot.lane.b32.xlu0 %v501, 16
      %v507 = vpop.permute.xlu0 %506
      %vm508 = vcmask 130048
      %v509 = vsel %vm508, %v505, %v507
      %511 = vst [vmem:[#allocation4 + $0x8] sm:$0xff] %v509
      %v512 = vld [vmem:[#allocation3] sm:$0xff]
      %v513 = vld [vmem:[#allocation3 + $0x8] sm:$0xff]
      %516 = vrot.lane.b32.xlu0 %v512, 15
      %v517 = vpop.permute.xlu0 %516
      %518 = vrot.lane.b32.xlu0 %v513, 15
      %v519 = vpop.permute.xlu0 %518
      %vm520 = vcmask 121856
      %v521 = vsel %vm520, %v517, %v519
      %523 = vst [vmem:[#allocation4 + $0x10] sm:$0xff] %v521
      %v524 = vld [vmem:[#allocation3] sm:$0xff]
      %v525 = vld [vmem:[#allocation3 + $0x8] sm:$0xff]
      %528 = vrot.lane.b32.xlu0 %v524, 1
      %v529 = vpop.permute.xlu0 %528
      %530 = vrot.lane.b32.xlu0 %v525, 1
      %v531 = vpop.permute.xlu0 %530
      %vm532 = vcmask 7168
      %v533 = vsel %vm532, %v529, %v531
      %535 = vst [vmem:[#allocation4 + $0x18] sm:$0xff] %v533
      %v536 = vld [vmem:[#allocation3 + $0x8] sm:$0xff]
      %537 = vst [vmem:[#allocation4 + $0x20] sm:$0xff] %v536
      %v538 = vld [vmem:[#allocation3 + $0x8] sm:$0xff]
      %v539 = vld [vmem:[#allocation3 + $0x10] sm:$0xff]
      %542 = vrot.lane.b32.xlu0 %v538, 127
      %v543 = vpop.permute.xlu0 %542
      %544 = vrot.lane.b32.xlu0 %v539, 127
      %v545 = vpop.permute.xlu0 %544
      %v546 = vsel %vm299, %v543, %v545
      %548 = vst [vmem:[#allocation4 + $0x28] sm:$0xff] %v546
      %v549 = vld [vmem:[#allocation3 + $0x8] sm:$0xff]
      %v550 = vld [vmem:[#allocation3 + $0x10] sm:$0xff]
      %553 = vrot.lane.b32.xlu0 %v549, 113
      %v554 = vpop.permute.xlu0 %553
      %555 = vrot.lane.b32.xlu0 %v550, 113
      %v556 = vpop.permute.xlu0 %555
      %vm557 = vcmask 924672
      %v558 = vsel %vm557, %v554, %v556
      %560 = vst [vmem:[#allocation4 + $0x30] sm:$0xff] %v558
      %v561 = vld [vmem:[#allocation3 + $0x8] sm:$0xff]
      %v562 = vld [vmem:[#allocation3 + $0x10] sm:$0xff]
      %565 = vrot.lane.b32.xlu0 %v561, 112
      %v566 = vpop.permute.xlu0 %565
      %567 = vrot.lane.b32.xlu0 %v562, 112
      %v568 = vpop.permute.xlu0 %567
      %v569 = vsel %vm334, %v566, %v568
      %571 = vst [vmem:[#allocation4 + $0x38] sm:$0xff] %v569
      %v572 = vld [vmem:[#allocation3 + $0x8] sm:$0xff]
      %v573 = vld [vmem:[#allocation3 + $0x10] sm:$0xff]
      %576 = vrot.lane.b32.xlu0 %v572, 111
      %v577 = vpop.permute.xlu0 %576
      %578 = vrot.lane.b32.xlu0 %v573, 111
      %v579 = vpop.permute.xlu0 %578
      %v580 = vsel %vm369, %v577, %v579
      %582 = vst [vmem:[#allocation4 + $0x40] sm:$0xff] %v580
      %v583 = vld [vmem:[%s3] sm:$0xff]
      %v584 = vld [vmem:[%s3 + $0x8] sm:$0xff]
      %v585 = vld [vmem:[%s3 + $0x10] sm:$0xff]
      %v586 = vld [vmem:[%s3 + $0x18] sm:$0xff]
      %v587 = vld [vmem:[#allocation4] sm:$0xff]
      %v588 = vld [vmem:[#allocation4 + $0x8] sm:$0xff]
      %v589 = vld [vmem:[#allocation4 + $0x10] sm:$0xff]
      %v590 = vld [vmem:[#allocation4 + $0x18] sm:$0xff]
      %v591 = vld [vmem:[#allocation4 + $0x20] sm:$0xff]
      %v592 = vld [vmem:[#allocation4 + $0x28] sm:$0xff]
      %v593 = vld [vmem:[#allocation4 + $0x30] sm:$0xff]
      %v594 = vld [vmem:[#allocation4 + $0x38] sm:$0xff]
      %v595 = vld [vmem:[#allocation4 + $0x40] sm:$0xff]
      %v596 = vld [vmem:[%s4] sm:$0xff]
      %v597 = vld [vmem:[%s4 + $0x8] sm:$0xff]
      %v598 = vld [vmem:[%s4 + $0x10] sm:$0xff]
      %v599 = vld [vmem:[%s4 + $0x18] sm:$0xff]
      %601 = vset.pattern.permute.xlu0 0
      %602 = vperm.xlu0 %601, %v596
      %v603 = vpop.permute.xlu0 %602
      %606 = vset.pattern.permute.xlu0 0
      %607 = vperm.xlu0 %606, %v597
      %v608 = vpop.permute.xlu0 %607
      %611 = vset.pattern.permute.xlu0 0
      %612 = vperm.xlu0 %611, %v598
      %v613 = vpop.permute.xlu0 %612
      %616 = vset.pattern.permute.xlu0 0
      %617 = vperm.xlu0 %616, %v599
      %v618 = vpop.permute.xlu0 %617
      %v624 = vunpack.c.l.b16 %v583
      %v625 = vunpack.c.h.b16 %v583
      %v626 = vunpack.c.l.b16 %v584
      %v627 = vunpack.c.h.b16 %v584
      %v628 = vunpack.c.l.b16 %v585
      %v629 = vunpack.c.h.b16 %v585
      %v630 = vunpack.c.l.b16 %v586
      %v631 = vunpack.c.h.b16 %v586
      %v632 = vpack.c.b16 %v626, %v624
      %v633 = vpack.c.b16 %v627, %v625
      %v634 = vpack.c.b16 %v630, %v628
      %v635 = vpack.c.b16 %v631, %v629
      %vm638 = vcmask 130048
      %v640 = vsel %vm638, %v633, 0
      %v643 = vsel %vm638, %v635, 0
      %645 = vmatprep.subr.bf16.mxu0 0
      %646 = vmatpush1.bf16.msra.mxu0 %v587
      %647 = vmatprep.subr.bf16.mxu0 0
      %648 = vmatpush1.bf16.msra.mxu0 %v588
      %649 = vmatprep.subr.bf16.mxu0 0
      %650 = vmatpush1.bf16.msra.mxu0 %v589
      %651 = vmatprep.subr.bf16.mxu0 0
      %652 = vmatpush1.bf16.msra.mxu0 %v590
      %653 = vmatprep.subr.bf16.mxu0 0
      %654 = vmatpush1.bf16.msra.mxu0 %v591
      %655 = vmatprep.subr.bf16.mxu0 0
      %656 = vmatpush1.bf16.msra.mxu0 %v592
      %657 = vmatprep.subr.bf16.mxu0 0
      %658 = vmatpush1.bf16.msra.mxu0 %v593
      %659 = vmatprep.subr.bf16.mxu0 0
      %660 = vmatpush1.bf16.msra.mxu0 %v594
      %661 = vmatprep.subr.bf16.mxu0 0
      %662 = vmatpush1.bf16.msra.mxu0 %v595
      %663 = vmatprep.subr.bf16.mxu0 0
      %664 = vmatpush1.bf16.msra.mxu0 0
      %665 = vmatprep.subr.bf16.mxu0 0
      %666 = vmatpush1.bf16.msra.mxu0 0
      %667 = vmatprep.subr.bf16.mxu0 0
      %668 = vmatpush1.bf16.msra.mxu0 0
      %669 = vmatprep.subr.bf16.mxu0 0
      %670 = vmatpush1.bf16.msra.mxu0 0
      %671 = vmatprep.subr.bf16.mxu0 0
      %672 = vmatpush1.bf16.msra.mxu0 0
      %673 = vmatprep.subr.bf16.mxu0 0
      %674 = vmatpush1.bf16.msra.mxu0 0
      %675 = vmatprep.subr.bf16.mxu0 0
      %676 = vmatpush1.bf16.msra.mxu0 0
      %677 = vmatprep.mubr.bf16.mxu0 %v640
      %678 = vmatmul.mubr.bf16.gmra.mrb[0].mxu0 %v632
      %v679 = vpop.f32.mrb[0].mxu0
      %v680 = vadd.f32 %v603, %v679
      %v681 = vpop.f32.mrb[0].mxu0
      %v682 = vpop.f32.mrb[0].mxu0
      %v683 = vadd.f32 %v608, %v682
      %v684 = vpop.f32.mrb[0].mxu0
      %685 = vmatprep.mubr.bf16.mxu0 %v643
      %686 = vmatmul.mubr.bf16.gmra.mrb[0].mxu0 %v634
      %v687 = vpop.f32.mrb[0].mxu0
      %v688 = vadd.f32 %v613, %v687
      %v689 = vpop.f32.mrb[0].mxu0
      %v690 = vpop.f32.mrb[0].mxu0
      %v691 = vadd.f32 %v618, %v690
      %v692 = vpop.f32.mrb[0].mxu0
      %693 = vdwg.mxu0
      %v694 = vmul.f32 %v680, %v450
      %v695 = vmul.f32 %v683, %v450
      %v696 = vmul.f32 %v688, %v450
      %v697 = vmul.f32 %v691, %v450
      %698 = vadd.xlane.f32.xlu0 %v694
      %v699 = vpop.xlane.xlu0 %698
      %700 = vadd.xlane.f32.xlu0 %v695
      %v701 = vpop.xlane.xlu0 %700
      %702 = vadd.xlane.f32.xlu0 %v696
      %v703 = vpop.xlane.xlu0 %702
      %704 = vadd.xlane.f32.xlu0 %v697
      %v705 = vpop.xlane.xlu0 %704
      %v706 = vadd.f32 %v699, %v701
      %v707 = vadd.f32 %v706, %v703
      %v708 = vadd.f32 %v707, %v705
      %v709 = vmul.f32 %v708, 0.00390625
      %711 = vset.pattern.permute.xlu0 0
      %712 = vperm.xlu0 %711, %v709
      %v713 = vpop.permute.xlu0 %712
      %v715 = vsub.f32 %v680, %v713
      %v716 = vsub.f32 %v683, %v713
      %v717 = vsub.f32 %v688, %v713
      %v718 = vsub.f32 %v691, %v713
      %v719 = vmul.f32 %v715, %v450
      %v720 = vmul.f32 %v716, %v450
      %v721 = vmul.f32 %v717, %v450
      %v722 = vmul.f32 %v718, %v450
      %v723 = vmul.f32 %v719, %v719
      %v724 = vmul.f32 %v720, %v720
      %v725 = vmul.f32 %v721, %v721
      %v726 = vmul.f32 %v722, %v722
      %727 = vadd.xlane.f32.xlu0 %v723
      %v728 = vpop.xlane.xlu0 %727
      %729 = vadd.xlane.f32.xlu0 %v724
      %v730 = vpop.xlane.xlu0 %729
      %731 = vadd.xlane.f32.xlu0 %v725
      %v732 = vpop.xlane.xlu0 %731
      %733 = vadd.xlane.f32.xlu0 %v726
      %v734 = vpop.xlane.xlu0 %733
      %v735 = vadd.f32 %v728, %v730
      %v736 = vadd.f32 %v735, %v732
      %v737 = vadd.f32 %v736, %v734
      %v738 = vmul.f32 %v737, 0.00390625
      %v739 = vadd.f32 %v738, 1e-05
      %v740 = vrsqrt.pop %v739
      %742 = vset.pattern.permute.xlu0 0
      %743 = vperm.xlu0 %742, %v740
      %v744 = vpop.permute.xlu0 %743
      %v746 = vmul.f32 %v719, %v744
      %v747 = vmul.f32 %v720, %v744
      %v748 = vmul.f32 %v721, %v744
      %v749 = vmul.f32 %v722, %v744
      %v750 = vmax.f32 %v746, 0.0
      %v751 = vmax.f32 %v747, 0.0
      %v752 = vmax.f32 %v748, 0.0
      %v753 = vmax.f32 %v749, 0.0
      %754 = vst [vmem:[%s251] sm:$0xf] %v750
      %755 = vst [vmem:[%s251 + $0x4] sm:$0xf] %v751
      %756 = vst [vmem:[%s251 + $0x8] sm:$0xf] %v752
      %757 = vst [vmem:[%s251 + $0xc] sm:$0xf] %v753
      %p758 = scmp.lt.s32.totalorder %s17, 1
      %s759 = scalar_select %p758, %s17, 1
      %s760 = smul.addr %s759, 4
      %s761 = smul.addr %s760, 4
      %s762 = scalar_lea.vmem %s6, %s761
      // Predicated region
      $region45: #{unet_module_forward.1} parent=43 // pred_check
        %p763 = pneg %p166
      $region46: #{unet_module_forward.1} parent=43 // pred_check_branch
        %765 = sbr.rel (%p763) target = $region48
      $region47: #{unet_module_forward.1} parent=43 // pred_region
        _
      $region48: #{unet_module_forward.1} parent=43 // pred_fallthru
        _
    $region44: #{unet_module_forward.1} parent=5 // pred_fallthru
      _
    %p766 = scmp.le.s32.totalorder 2, %s12
    // Predicated region
    $region49: #{unet_module_forward.1} parent=5 // pred_check
      %p767 = pneg %p766
    $region50: #{unet_module_forward.1} parent=5 // pred_check_branch
      %769 = sbr.rel (%p767) target = $region52
    $region51: #{unet_module_forward.1} parent=5 // pred_region
      %s770 = ssub.s32 %s12, 2
      // Predicated region
      $region53: #{unet_module_forward.1} parent=51 // pred_check
        %p771 = pneg %p172
      $region54: #{unet_module_forward.1} parent=51 // pred_check_branch
        %773 = sbr.rel (%p771) target = $region56
      $region55: #{unet_module_forward.1} parent=51 // pred_region
        %p774 = scmp.lt.s32.totalorder %s18, 1
        %s775 = scalar_select %p774, %s18, 1
        %s776 = smul.addr %s775, 4
        %s777 = smul.addr %s776, 4
        %s778 = scalar_lea.vmem %s6, %s777
      $region56: #{unet_module_forward.1} parent=51 // pred_fallthru
        _
    $region52: #{unet_module_forward.1} parent=5 // pred_fallthru
      _
  $region6: #{unet_module_forward.1} parent=0 // loop_footer
    %s16 = sadd.s32 1, %s12
  $region7: #{unet_module_forward.1} parent=0 // loop_footer_branch
    %11 = sbr.rel target = $region3
  $region8: #{unet_module_forward.1} parent=0 // loop_exit
    _

</llo_original>
